<compile_context>
chip_gen: v5e
topology: v5e:2x2
jax: 0.10.0
libtpu: 0.0.40
codegen_flags: <defaults>
</compile_context>

<pallas_src>
import functools

import jax
import jax.numpy as jnp
from jax.experimental import pallas as pl
from jax.experimental.pallas import tpu as pltpu


def make_divisible(v, divisor=8, min_value=None):
    min_value = min_value or divisor
    new_v = max(min_value, int(v + divisor / 2) // divisor * divisor)
    if new_v < 0.9 * v:
        new_v += divisor
    return new_v


# ---------------------------------------------------------------------------
# Tiling helpers (layout-minimum rounding only)
# ---------------------------------------------------------------------------

_LANE_TILE_TARGET = 512      # multipass lane tile (v7x could use 1024; 512 is
                             # safe on v5e, which has no bf16 VPU)
_ROW_TILE_TARGET = 512       # multipass sublane tile
_FUSED_VMEM_BUDGET = 8 * 1024 * 1024   # in+out double-buffered ~= 4x slab;
                                       # conservative vs v7x 32 MiB scoped VMEM


def _sublane_pack(dtype):
    """Rows per packed sublane group: 8 for f32, 16 for bf16, 32 for int8/fp8."""
    return max(8, 32 // jnp.dtype(dtype).itemsize)


def _row_tile(rows, dtype):
    """Second-minor tile: full dim if small (always layout-legal), else an
    aligned tile <= target."""
    if rows <= _ROW_TILE_TARGET:
        return rows
    sub = _sublane_pack(dtype)
    return (_ROW_TILE_TARGET // sub) * sub


def _lane_tile(hw):
    """Minor tile: full dim if small (legal even when not a 128-multiple, so
    HW=49/196/... moves only real bytes), else a 128-multiple tile."""
    if hw <= _LANE_TILE_TARGET:
        return hw
    return _LANE_TILE_TARGET


# ---------------------------------------------------------------------------
# Kernels
# ---------------------------------------------------------------------------

def _fused_se_kernel(x_ref, w1_ref, b1_ref, w2_ref, b2_ref, o_ref, *, pool_prec):
    # x_ref / o_ref: (C, HW) for one image (leading N dim squeezed by BlockSpec).
    x = x_ref[...]
    # Global average pool as an MXU ones-dot: f32 accumulation without casting
    # the whole slab; the 1/HW mean scale is pre-folded into w1.
    ones = jnp.ones((x.shape[1], 1), dtype=x.dtype)
    pooled = jnp.dot(x, ones, preferred_element_type=jnp.float32,
                     precision=pool_prec)                          # (C, 1) sums
    # SE MLP (tiny, all f32): relu(conv_reduce) -> sigmoid(conv_expand).
    y1 = jnp.dot(w1_ref[...], pooled, preferred_element_type=jnp.float32,
                 precision=jax.lax.Precision.HIGHEST) + b1_ref[...]
    y1 = jnp.maximum(y1, 0.0)
    y2 = jnp.dot(w2_ref[...], y1, preferred_element_type=jnp.float32,
                 precision=jax.lax.Precision.HIGHEST) + b2_ref[...]
    gate = jax.nn.sigmoid(y2).astype(x.dtype)                      # (C, 1), one cast
    # Excite the resident slab (native-dtype broadcast multiply).
    o_ref[...] = x * gate


def _pool_kernel(x_ref, sum_ref, *, lane_rem, pool_prec):
    # x_ref: (Tr, Thw); sum_ref: (Tr, 1) f32 accumulator resident across the
    # "arbitrary" HW grid axis.
    h = pl.program_id(1)

    @pl.when(h == 0)
    def _init():
        sum_ref[...] = jnp.zeros_like(sum_ref)

    x = x_ref[...]
    if lane_rem:
        # Ragged last lane tile: zero the out-of-range columns BEFORE the
        # reduction (buffer contents past the array edge are stale).
        col = jax.lax.broadcasted_iota(jnp.int32, x.shape, 1)
        keep = (h < pl.num_programs(1) - 1) | (col < lane_rem)
        x = jnp.where(keep, x, jnp.zeros_like(x))
    ones = jnp.ones((x.shape[1], 1), dtype=x.dtype)
    sum_ref[...] += jnp.dot(x, ones, preferred_element_type=jnp.float32,
                            precision=pool_prec)


def _excite_kernel(x_ref, g_ref, o_ref):
    # Native-dtype broadcast multiply; out-of-bounds rows/lanes of the edge
    # tiles are dropped by the pipeline on store (no wrapper pad/slice).
    o_ref[...] = x_ref[...] * g_ref[...]


# ---------------------------------------------------------------------------
# Wrapper
# ---------------------------------------------------------------------------

@functools.partial(jax.jit, static_argnames=("force_multipass",))
def squeeze_excite(x_nchw, w_reduce, b_reduce, w_expand, b_expand,
                   *, force_multipass=False):
    """x_nchw: (N, C, H, W). w_reduce: (Cr, C), b_reduce: (Cr,),
    w_expand: (C, Cr), b_expand: (C,). Returns (N, C, H, W)."""
    N, C, H, W = x_nchw.shape
    Cr = w_reduce.shape[0]
    HW = H * W
    dtype = x_nchw.dtype
    itemsize = jnp.dtype(dtype).itemsize

    # f32 inputs: force full-precision MXU dots so the pooled sums match the
    # f32 reference (default TPU precision truncates f32 -> bf16).
    pool_prec = (jax.lax.Precision.HIGHEST
                 if jnp.dtype(dtype) == jnp.float32 else None)

    f32 = jnp.float32
    inv_hw = 1.0 / float(HW)
    w1s = w_reduce.astype(f32) * inv_hw            # fold the mean's 1/HW scale
    b1 = b_reduce.astype(f32).reshape(Cr, 1)
    w2 = w_expand.astype(f32)
    b2 = b_expand.astype(f32).reshape(C, 1)

    x3d = x_nchw.reshape(N, C, HW)                 # pure reshape, no data movement

    slab_bytes = C * HW * itemsize                 # per-image resident slab
    use_fused = (not force_multipass) and (4 * slab_bytes <= _FUSED_VMEM_BUDGET)

    if use_fused:
        # -------- fused single-pass kernel: 1 HBM read + 1 HBM write --------
        out3d = pl.pallas_call(
            functools.partial(_fused_se_kernel, pool_prec=pool_prec),
            out_shape=jax.ShapeDtypeStruct((N, C, HW), dtype),
            grid=(N,),
            in_specs=[
                pl.BlockSpec((None, C, HW), lambda n: (n, 0, 0)),   # x slab
                pl.BlockSpec((Cr, C), lambda n: (0, 0)),            # w_reduce/HW
                pl.BlockSpec((Cr, 1), lambda n: (0, 0)),            # b_reduce
                pl.BlockSpec((C, Cr), lambda n: (0, 0)),            # w_expand
                pl.BlockSpec((C, 1), lambda n: (0, 0)),             # b_expand
            ],
            out_specs=pl.BlockSpec((None, C, HW), lambda n: (n, 0, 0)),
            compiler_params=pltpu.CompilerParams(
                dimension_semantics=("parallel",)),
        )(x3d, w1s, b1, w2, b2)
        return out3d.reshape(N, C, H, W)

    # ------------- multipass fallback (slab does not fit VMEM) --------------
    R = N * C
    x2d = x3d.reshape(R, HW)                       # pure reshape
    Tr = _row_tile(R, dtype)
    Thw = _lane_tile(HW)
    grid = (pl.cdiv(R, Tr), pl.cdiv(HW, Thw))
    lane_rem = HW % Thw                            # static; 0 => no masking code

    # Pass 1: per-(image, channel) spatial sums in f32 (HW = reduction axis).
    sums = pl.pallas_call(
        functools.partial(_pool_kernel, lane_rem=lane_rem, pool_prec=pool_prec),
        out_shape=jax.ShapeDtypeStruct((R, 1), jnp.float32),
        grid=grid,
        in_specs=[pl.BlockSpec((Tr, Thw), lambda r, h: (r, h))],
        out_specs=pl.BlockSpec((Tr, 1), lambda r, h: (r, 0)),
        compiler_params=pltpu.CompilerParams(
            dimension_semantics=("parallel", "arbitrary")),
    )(x2d)

    # Pass 2: tiny SE MLP in plain jnp (microseconds of work; a dedicated
    # grid=(1,) kernel was pure launch overhead).
    pooled = sums.reshape(N, C)                                    # f32 sums
    y1 = jnp.maximum(
        jnp.dot(pooled, w1s.T, precision=jax.lax.Precision.HIGHEST)
        + b_reduce.astype(f32)[None, :], 0.0)                      # (N, Cr)
    y2 = (jnp.dot(y1, w2.T, precision=jax.lax.Precision.HIGHEST)
          + b_expand.astype(f32)[None, :])                         # (N, C)
    gate_rows = jax.nn.sigmoid(y2).astype(dtype).reshape(R, 1)     # one cast

    # Pass 3: excite; both axes "parallel", lane-dense output tiles, ragged
    # edges handled by the pipeline (partial reads, dropped OOB stores).
    # TODO(synk): alias x2d -> out2d via input_output_aliases when the caller
    # donates x; x is a live (non-donated) jit argument here so aliasing would
    # just force an XLA copy.
    out2d = pl.pallas_call(
        _excite_kernel,
        out_shape=jax.ShapeDtypeStruct((R, HW), dtype),
        grid=grid,
        in_specs=[
            pl.BlockSpec((Tr, Thw), lambda r, h: (r, h)),
            pl.BlockSpec((Tr, 1), lambda r, h: (r, 0)),
        ],
        out_specs=pl.BlockSpec((Tr, Thw), lambda r, h: (r, h)),
        compiler_params=pltpu.CompilerParams(
            dimension_semantics=("parallel", "parallel")),
    )(x2d, gate_rows)

    return out2d.reshape(N, C, H, W)


# ---------------------------------------------------------------------------
# Reference (pure JAX, mirrors the PyTorch module; f32 math, HIGHEST matmuls)
# ---------------------------------------------------------------------------

def reference_se(x, w1, b1, w2, b2):
    hp = jax.lax.Precision.HIGHEST
    f32 = jnp.float32
    x_se = jnp.mean(x.astype(f32), axis=(2, 3), keepdims=True)         # (N,C,1,1)
    x_se = jnp.einsum("rc,ncij->nrij", w1.astype(f32), x_se,
                      precision=hp) + b1.astype(f32)[None, :, None, None]
    x_se = jnp.maximum(x_se, 0.0)
    x_se = jnp.einsum("cr,nrij->ncij", w2.astype(f32), x_se,
                      precision=hp) + b2.astype(f32)[None, :, None, None]
    return (x.astype(f32) * jax.nn.sigmoid(x_se)).astype(x.dtype)


if __name__ == "__main__":
    # Module config: in_chs=4, se_ratio=0.25, divisor=1  ->  reduced_chs=1
    in_chs = 4
    se_ratio = 0.25
    divisor = 1
    reduced_chs = make_divisible(in_chs * se_ratio, divisor)

    key = jax.random.PRNGKey(0)
    kx, k1, kb1, k2, kb2, kx2, kx3 = jax.random.split(key, 7)

    # Deterministic synthetic parameters (1x1 conv weights squeezed to 2D).
    w_reduce = jax.random.normal(k1, (reduced_chs, in_chs), jnp.float32) * 0.5
    b_reduce = jax.random.normal(kb1, (reduced_chs,), jnp.float32) * 0.1
    w_expand = jax.random.normal(k2, (in_chs, reduced_chs), jnp.float32) * 0.5
    b_expand = jax.random.normal(kb2, (in_chs,), jnp.float32) * 0.1

    def run_and_check(x, force_multipass=False):
        out = squeeze_excite(x, w_reduce, b_reduce, w_expand, b_expand,
                             force_multipass=force_multipass)
        out = jax.block_until_ready(out)
        ref = reference_se(x, w_reduce, b_reduce, w_expand, b_expand)
        assert out.shape == x.shape and out.dtype == x.dtype
        err = float(jnp.max(jnp.abs(out.astype(jnp.float32)
                                    - ref.astype(jnp.float32))))
        assert err < 1e-4, err

    # 1) Fused single-kernel path, 128-multiple spatial size (HW=256).
    run_and_check(jax.random.normal(kx, (2, in_chs, 16, 16), jnp.float32))
    # 2) Fused path, odd spatial size (HW=49): full-dim lane block, no padding.
    run_and_check(jax.random.normal(kx2, (2, in_chs, 7, 7), jnp.float32))
    # 3) Multipass fallback, ragged last lane tile (HW=676 -> 512 + 164 masked).
    run_and_check(jax.random.normal(kx3, (2, in_chs, 26, 26), jnp.float32),
                  force_multipass=True)

    print("KERNEL_OK")
</pallas_src>

<mosaic_0001>
module attributes {stable_mosaic.version = 11 : i64} {
  func.func @_fused_se_kernel(%arg0: i32, %arg1: memref<1x4x256xf32, #tpu.memory_space<vmem>>, %arg2: memref<1x4xf32, #tpu.memory_space<vmem>>, %arg3: memref<1x1xf32, #tpu.memory_space<vmem>>, %arg4: memref<4x1xf32, #tpu.memory_space<vmem>>, %arg5: memref<4x1xf32, #tpu.memory_space<vmem>>, %arg6: memref<1x4x256xf32, #tpu.memory_space<vmem>>) attributes {dimension_semantics = [#tpu.dimension_semantics<parallel>], iteration_bounds = array<i64: 2>, scalar_prefetch = 0 : i64, scratch_operands = 0 : i64, tpu.core_type = #tpu.core_type<tc>, window_params = [{transform_indices = @transform_0, window_bounds = array<i64: 1, 4, 256>}, {pipeline_mode = #tpu.pipeline_mode<synchronous>, transform_indices = @transform_1, window_bounds = array<i64: 1, 4>}, {pipeline_mode = #tpu.pipeline_mode<synchronous>, transform_indices = @transform_2, window_bounds = array<i64: 1, 1>}, {pipeline_mode = #tpu.pipeline_mode<synchronous>, transform_indices = @transform_3, window_bounds = array<i64: 4, 1>}, {pipeline_mode = #tpu.pipeline_mode<synchronous>, transform_indices = @transform_4, window_bounds = array<i64: 4, 1>}, {transform_indices = @transform_5, window_bounds = array<i64: 1, 4, 256>}]} {
    %c0 = arith.constant 0 : index
    %c0_0 = arith.constant 0 : index
    %c0_1 = arith.constant 0 : index
    %0 = vector.load %arg1[%c0, %c0_0, %c0_1] : memref<1x4x256xf32, #tpu.memory_space<vmem>>, vector<1x4x256xf32>
    %1 = vector.shape_cast %0 : vector<1x4x256xf32> to vector<4x256xf32>
    %cst = arith.constant 1.000000e+00 : f32
    %2 = vector.broadcast %cst : f32 to vector<256x1xf32>
    %cst_2 = arith.constant dense<0.000000e+00> : vector<4x1xf32>
    %3 = tpu.matmul %1, %2, %cst_2 {dimension_numbers = #tpu.dot_dimension_numbers<[1], [0], [0], [1], [0, 0, 1, 1], [], []>, precision = #tpu.contract_precision<fp32>} : vector<4x256xf32>, vector<256x1xf32>, vector<4x1xf32> -> vector<4x1xf32>
    %c0_3 = arith.constant 0 : index
    %c0_4 = arith.constant 0 : index
    %4 = vector.load %arg2[%c0_3, %c0_4] : memref<1x4xf32, #tpu.memory_space<vmem>>, vector<1x4xf32>
    %cst_5 = arith.constant dense<0.000000e+00> : vector<1x1xf32>
    %5 = tpu.matmul %4, %3, %cst_5 {dimension_numbers = #tpu.dot_dimension_numbers<[1], [0], [0], [1], [0, 0, 1, 1], [], []>, precision = #tpu.contract_precision<fp32>} : vector<1x4xf32>, vector<4x1xf32>, vector<1x1xf32> -> vector<1x1xf32>
    %c0_6 = arith.constant 0 : index
    %c0_7 = arith.constant 0 : index
    %6 = vector.load %arg3[%c0_6, %c0_7] : memref<1x1xf32, #tpu.memory_space<vmem>>, vector<1x1xf32>
    %7 = arith.addf %5, %6 : vector<1x1xf32>
    %cst_8 = arith.constant 0.000000e+00 : f32
    %8 = vector.broadcast %cst_8 : f32 to vector<1x1xf32>
    %9 = arith.maximumf %7, %8 : vector<1x1xf32>
    %c0_9 = arith.constant 0 : index
    %c0_10 = arith.constant 0 : index
    %10 = vector.load %arg4[%c0_9, %c0_10] : memref<4x1xf32, #tpu.memory_space<vmem>>, vector<4x1xf32>
    %cst_11 = arith.constant dense<0.000000e+00> : vector<4x1xf32>
    %11 = tpu.matmul %10, %9, %cst_11 {dimension_numbers = #tpu.dot_dimension_numbers<[1], [0], [0], [1], [0, 0, 1, 1], [], []>, precision = #tpu.contract_precision<fp32>} : vector<4x1xf32>, vector<1x1xf32>, vector<4x1xf32> -> vector<4x1xf32>
    %c0_12 = arith.constant 0 : index
    %c0_13 = arith.constant 0 : index
    %12 = vector.load %arg5[%c0_12, %c0_13] : memref<4x1xf32, #tpu.memory_space<vmem>>, vector<4x1xf32>
    %13 = arith.addf %11, %12 : vector<4x1xf32>
    %14 = arith.negf %13 : vector<4x1xf32>
    %15 = math.exp %14 : vector<4x1xf32>
    %cst_14 = arith.constant 1.000000e+00 : f32
    %16 = vector.broadcast %cst_14 : f32 to vector<4x1xf32>
    %17 = arith.addf %16, %15 : vector<4x1xf32>
    %18 = arith.divf %16, %17 : vector<4x1xf32>
    %19 = vector.broadcast %18 : vector<4x1xf32> to vector<4x256xf32>
    %20 = arith.mulf %1, %19 : vector<4x256xf32>
    %c0_15 = arith.constant 0 : index
    %c0_16 = arith.constant 0 : index
    %c0_17 = arith.constant 0 : index
    %21 = vector.load %arg6[%c0_15, %c0_16, %c0_17] : memref<1x4x256xf32, #tpu.memory_space<vmem>>, vector<1x4x256xf32>
    %22 = vector.shape_cast %21 : vector<1x4x256xf32> to vector<4x256xf32>
    %23 = vector.shape_cast %20 : vector<4x256xf32> to vector<1x4x256xf32>
    tpu.vector_store %arg6[%c0_15, %c0_16, %c0_17], %23 {strides = array<i32>} : memref<1x4x256xf32, #tpu.memory_space<vmem>>, vector<1x4x256xf32>,
    return
  }
  func.func @transform_0(%arg0: i32) -> (i32, i32, i32) {
    %c0_i32 = arith.constant 0 : i32
    %c0_i32_0 = arith.constant 0 : i32
    %c0_i32_1 = arith.constant 0 : i32
    return %arg0, %c0_i32, %c0_i32_0 : i32, i32, i32
  }
  func.func @transform_1(%arg0: i32) -> (i32, i32) {
    %c0_i32 = arith.constant 0 : i32
    %c0_i32_0 = arith.constant 0 : i32
    %c0_i32_1 = arith.constant 0 : i32
    return %c0_i32, %c0_i32_0 : i32, i32
  }
  func.func @transform_2(%arg0: i32) -> (i32, i32) {
    %c0_i32 = arith.constant 0 : i32
    %c0_i32_0 = arith.constant 0 : i32
    %c0_i32_1 = arith.constant 0 : i32
    return %c0_i32, %c0_i32_0 : i32, i32
  }
  func.func @transform_3(%arg0: i32) -> (i32, i32) {
    %c0_i32 = arith.constant 0 : i32
    %c0_i32_0 = arith.constant 0 : i32
    %c0_i32_1 = arith.constant 0 : i32
    return %c0_i32, %c0_i32_0 : i32, i32
  }
  func.func @transform_4(%arg0: i32) -> (i32, i32) {
    %c0_i32 = arith.constant 0 : i32
    %c0_i32_0 = arith.constant 0 : i32
    %c0_i32_1 = arith.constant 0 : i32
    return %c0_i32, %c0_i32_0 : i32, i32
  }
  func.func @transform_5(%arg0: i32) -> (i32, i32, i32) {
    %c0_i32 = arith.constant 0 : i32
    %c0_i32_0 = arith.constant 0 : i32
    %c0_i32_1 = arith.constant 0 : i32
    return %arg0, %c0_i32, %c0_i32_0 : i32, i32, i32
  }
}

</mosaic_0001>

<llo_original>
// kernel: squeeze_excite.1
$region0: #{squeeze_excite.1}
  #allocation0 [shape = 'u32[]', space=smem, size = 0x4, offset = 0x4, fixed_abs, tag = 'smem constant byte address 0x4 - core index']
  #allocation1 [shape = 'u32[72,128]{1,0:T(1,128)}', space=vmem, size = 0x9000, scoped, tag = 'internal scratch']
  #allocation2 [shape = 'f32[1,1]{1,0:T(1,128)S(1)}', space=vmem, size = 0x200, scoped, tag = 'scoped memory for squeeze_excite.1']
  %s0 = inlined_call_operand.vmem [shape: f32[2,4,256], index: 0, kind: input, shape index: {}]
  %s1 = inlined_call_operand.vmem [shape: f32[1,4], index: 1, kind: input, shape index: {}]
  %s2 = inlined_call_operand.<no memory space> [shape: f32[1,1], index: 2, kind: input, shape index: {}]
  %s3 = inlined_call_operand.vmem [shape: f32[4,1], index: 3, kind: input, shape index: {}]
  %s4 = inlined_call_operand.vmem [shape: f32[4,1], index: 4, kind: input, shape index: {}]
  %s5 = inlined_call_operand.vmem [shape: f32[2,4,256], index: 5, kind: output, shape index: {}]
  %s6 = sld [smem:[#allocation0]]
  $region53: #{squeeze_excite.1} parent=0
    _
  %s8 = ssub.s32 1, %s6
  %s9 = scalar_select 0, %s8, %s6
  %v10 = vstv %s2
  %11 = vst [vmem:[#allocation2] sm:$0x1] %v10
  loop: start=0, step=1, limit=4
  $region2: #{squeeze_excite.1} parent=0 // loop_pre_header
    _
  $region3: #{squeeze_excite.1} parent=0 // loop_header
    %s13 = sphi 0, %s17
    %p14 = scmp.ge.s32.totalorder %s13, 4
    %s23 = sphi 0, %s25
    %s26 = sphi 0, %s23
    %s27 = sphi 0, %s26
    %s43 = sphi 0, %s27
    %s47 = sphi 0, %s47
    %s49 = sphi 0, %s47
    %s50 = sphi 0, %s49
    %s64 = sphi 0, %s50
    %s68 = sphi 0, %s68
    %s70 = sphi 0, %s68
    %s71 = sphi 0, %s70
    %s85 = sphi 0, %s71
    %s89 = sphi 0, %s89
    %s91 = sphi 0, %s89
    %s92 = sphi 0, %s91
    %s106 = sphi 0, %s92
    %s110 = sphi 0, %s110
    %s112 = sphi 0, %s110
    %s113 = sphi 0, %s112
    %s127 = sphi 0, %s113
    %s133 = sphi 0, %s135
    %s136 = sphi 0, %s133
    %s137 = sphi 0, %s136
    %s153 = sphi 0, %s137
  $region4: #{squeeze_excite.1} parent=0 // loop_header_branch
    %16 = sbr.rel (%p14) target = $region8
  $region5: #{squeeze_excite.1} parent=0 // loop_body
    %s18 = ssub.s32 %s13, 1
    %s19 = ssub.s32 %s13, 2
    %s20 = sadd.s32 %s13, 1
    %s21 = ssub.s32 %s13, %s20
    %p22 = scmp.eq.s32.totalorder %s21, 0
    %s24 = sadd.s32 %s23, 1
    %s25 = scalar_select %p22, %s23, %s24
    %p28 = pneg %p22
    %p29 = scmp.eq.s32.totalorder %s13, 1
    %p30 = por %p28, %p29
    %p31 = scmp.ne.s32.totalorder %s23, %s26
    %p32 = scmp.eq.s32.totalorder %s13, 0
    %p33 = por %p31, %p32
    %p34 = scmp.ne.s32.totalorder %s23, %s26
    %p35 = scmp.eq.s32.totalorder %s18, 1
    %p36 = por %p34, %p35
    %p37 = scmp.ne.s32.totalorder %s26, %s27
    %p38 = scmp.eq.s32.totalorder %s18, 0
    %p39 = por %p37, %p38
    %p40 = scmp.ne.s32.totalorder %s26, %s27
    %p41 = scmp.eq.s32.totalorder %s19, 1
    %p42 = por %p40, %p41
    %p44 = scmp.ne.s32.totalorder %s27, %s43
    %p45 = scmp.eq.s32.totalorder %s19, 0
    %p46 = por %p44, %p45
    %s48 = sadd.s32 %s47, 1
    %p51 = scmp.eq.s32.totalorder %s13, 1
    %p52 = scmp.ne.s32.totalorder %s47, %s49
    %p53 = scmp.eq.s32.totalorder %s13, 0
    %p54 = por %p52, %p53
    %p55 = scmp.ne.s32.totalorder %s47, %s49
    %p56 = scmp.eq.s32.totalorder %s18, 1
    %p57 = por %p55, %p56
    %p58 = scmp.ne.s32.totalorder %s49, %s50
    %p59 = scmp.eq.s32.totalorder %s18, 0
    %p60 = por %p58, %p59
    %p61 = scmp.ne.s32.totalorder %s49, %s50
    %p62 = scmp.eq.s32.totalorder %s19, 1
    %p63 = por %p61, %p62
    %p65 = scmp.ne.s32.totalorder %s50, %s64
    %p66 = scmp.eq.s32.totalorder %s19, 0
    %p67 = por %p65, %p66
    %s69 = sadd.s32 %s68, 1
    %p72 = scmp.eq.s32.totalorder %s13, 1
    %p73 = scmp.ne.s32.totalorder %s68, %s70
    %p74 = scmp.eq.s32.totalorder %s13, 0
    %p75 = por %p73, %p74
    %p76 = scmp.ne.s32.totalorder %s68, %s70
    %p77 = scmp.eq.s32.totalorder %s18, 1
    %p78 = por %p76, %p77
    %p79 = scmp.ne.s32.totalorder %s70, %s71
    %p80 = scmp.eq.s32.totalorder %s18, 0
    %p81 = por %p79, %p80
    %p82 = scmp.ne.s32.totalorder %s70, %s71
    %p83 = scmp.eq.s32.totalorder %s19, 1
    %p84 = por %p82, %p83
    %p86 = scmp.ne.s32.totalorder %s71, %s85
    %p87 = scmp.eq.s32.totalorder %s19, 0
    %p88 = por %p86, %p87
    %s90 = sadd.s32 %s89, 1
    %p93 = scmp.eq.s32.totalorder %s13, 1
    %p94 = scmp.ne.s32.totalorder %s89, %s91
    %p95 = scmp.eq.s32.totalorder %s13, 0
    %p96 = por %p94, %p95
    %p97 = scmp.ne.s32.totalorder %s89, %s91
    %p98 = scmp.eq.s32.totalorder %s18, 1
    %p99 = por %p97, %p98
    %p100 = scmp.ne.s32.totalorder %s91, %s92
    %p101 = scmp.eq.s32.totalorder %s18, 0
    %p102 = por %p100, %p101
    %p103 = scmp.ne.s32.totalorder %s91, %s92
    %p104 = scmp.eq.s32.totalorder %s19, 1
    %p105 = por %p103, %p104
    %p107 = scmp.ne.s32.totalorder %s92, %s106
    %p108 = scmp.eq.s32.totalorder %s19, 0
    %p109 = por %p107, %p108
    %s111 = sadd.s32 %s110, 1
    %p114 = scmp.eq.s32.totalorder %s13, 1
    %p115 = scmp.ne.s32.totalorder %s110, %s112
    %p116 = scmp.eq.s32.totalorder %s13, 0
    %p117 = por %p115, %p116
    %p118 = scmp.ne.s32.totalorder %s110, %s112
    %p119 = scmp.eq.s32.totalorder %s18, 1
    %p120 = por %p118, %p119
    %p121 = scmp.ne.s32.totalorder %s112, %s113
    %p122 = scmp.eq.s32.totalorder %s18, 0
    %p123 = por %p121, %p122
    %p124 = scmp.ne.s32.totalorder %s112, %s113
    %p125 = scmp.eq.s32.totalorder %s19, 1
    %p126 = por %p124, %p125
    %p128 = scmp.ne.s32.totalorder %s113, %s127
    %p129 = scmp.eq.s32.totalorder %s19, 0
    %p130 = por %p128, %p129
    %s131 = ssub.s32 %s13, %s20
    %p132 = scmp.eq.s32.totalorder %s131, 0
    %s134 = sadd.s32 %s133, 1
    %s135 = scalar_select %p132, %s133, %s134
    %p138 = pneg %p132
    %p139 = scmp.eq.s32.totalorder %s13, 1
    %p140 = por %p138, %p139
    %p141 = scmp.ne.s32.totalorder %s133, %s136
    %p142 = scmp.eq.s32.totalorder %s13, 0
    %p143 = por %p141, %p142
    %p144 = scmp.ne.s32.totalorder %s133, %s136
    %p145 = scmp.eq.s32.totalorder %s18, 1
    %p146 = por %p144, %p145
    %p147 = scmp.ne.s32.totalorder %s136, %s137
    %p148 = scmp.eq.s32.totalorder %s18, 0
    %p149 = por %p147, %p148
    %p150 = scmp.ne.s32.totalorder %s136, %s137
    %p151 = scmp.eq.s32.totalorder %s19, 1
    %p152 = por %p150, %p151
    %p154 = scmp.ne.s32.totalorder %s137, %s153
    %p155 = scmp.eq.s32.totalorder %s19, 0
    %p156 = por %p154, %p155
    %p157 = scmp.le.s32.totalorder 1, %s13
    %p158 = scmp.lt.s32.totalorder %s13, 3
    %p159 = pnand %p157, %p158
    %p160 = pneg %p159
    // Predicated region
    $region9: #{squeeze_excite.1} parent=5 // pred_check
      _
    $region10: #{squeeze_excite.1} parent=5 // pred_check_branch
      %162 = sbr.rel (%p159) target = $region12
    $region11: #{squeeze_excite.1} parent=5 // pred_region
      %s163 = ssub.s32 %s13, 1
      // Predicated region
      $region13: #{squeeze_excite.1} parent=11 // pred_check
        %p164 = pneg %p60
      $region14: #{squeeze_excite.1} parent=11 // pred_check_branch
        %166 = sbr.rel (%p164) target = $region16
      $region15: #{squeeze_excite.1} parent=11 // pred_region
        _
      $region16: #{squeeze_excite.1} parent=11 // pred_fallthru
        _
      // Predicated region
      $region17: #{squeeze_excite.1} parent=11 // pred_check
        %p167 = pneg %p81
      $region18: #{squeeze_excite.1} parent=11 // pred_check_branch
        %169 = sbr.rel (%p167) target = $region20
      $region19: #{squeeze_excite.1} parent=11 // pred_region
        _
      $region20: #{squeeze_excite.1} parent=11 // pred_fallthru
        _
      // Predicated region
      $region21: #{squeeze_excite.1} parent=11 // pred_check
        %p170 = pneg %p102
      $region22: #{squeeze_excite.1} parent=11 // pred_check_branch
        %172 = sbr.rel (%p170) target = $region24
      $region23: #{squeeze_excite.1} parent=11 // pred_region
        _
      $region24: #{squeeze_excite.1} parent=11 // pred_fallthru
        _
      // Predicated region
      $region25: #{squeeze_excite.1} parent=11 // pred_check
        %p173 = pneg %p123
      $region26: #{squeeze_excite.1} parent=11 // pred_check_branch
        %175 = sbr.rel (%p173) target = $region28
      $region27: #{squeeze_excite.1} parent=11 // pred_region
        _
      $region28: #{squeeze_excite.1} parent=11 // pred_fallthru
        _
    $region12: #{squeeze_excite.1} parent=5 // pred_fallthru
      _
    %p176 = scmp.lt.s32.totalorder %s13, 2
    // Predicated region
    $region29: #{squeeze_excite.1} parent=5 // pred_check
      %p177 = pneg %p176
    $region30: #{squeeze_excite.1} parent=5 // pred_check_branch
      %179 = sbr.rel (%p177) target = $region32
    $region31: #{squeeze_excite.1} parent=5 // pred_region
      // Predicated region
      $region33: #{squeeze_excite.1} parent=31 // pred_check
        %p180 = pneg %p33
      $region34: #{squeeze_excite.1} parent=31 // pred_check_branch
        %182 = sbr.rel (%p180) target = $region36
      $region35: #{squeeze_excite.1} parent=31 // pred_region
        %p183 = scmp.lt.s32.totalorder %s13, 1
        %s184 = scalar_select %p183, %s13, 1
        %s185 = smul.addr %s184, 2
        %s186 = smul.addr %s185, 4
        %s187 = scalar_lea.vmem %s0, %s186
      $region36: #{squeeze_excite.1} parent=31 // pred_fallthru
        _
    $region32: #{squeeze_excite.1} parent=5 // pred_fallthru
      _
    %p188 = scmp.le.s32.totalorder 1, %s13
    %p189 = scmp.lt.s32.totalorder %s13, 3
    %p190 = pnand %p188, %p189
    %p191 = pneg %p190
    // Predicated region
    $region37: #{squeeze_excite.1} parent=5 // pred_check
      _
    $region38: #{squeeze_excite.1} parent=5 // pred_check_branch
      %193 = sbr.rel (%p190) target = $region40
    $region39: #{squeeze_excite.1} parent=5 // pred_region
      %s194 = ssub.s32 %s13, 1
      %p195 = scmp.lt.s32.totalorder %s18, 1
      %s196 = scalar_select %p195, %s18, 1
      %s197 = smul.addr %s196, 2
      %s198 = smul.addr %s197, 4
      %s199 = scalar_lea.vmem %s0, %s198
      %p200 = pneg %p39
      %p201 = pneg %p36
      %p202 = pneg %p60
      %p203 = pneg %p57
      %p204 = pneg %p81
      %p205 = pneg %p78
      %p206 = pneg %p102
      %p207 = pneg %p99
      %p208 = pneg %p123
      %p209 = pneg %p120
      %p210 = pneg %p149
      %p211 = pneg %p146
      %p212 = scmp.lt.s32.totalorder %s18, 1
      %s213 = scalar_select %p212, %s18, 1
      %s214 = smul.addr %s213, 2
      %s215 = smul.addr %s214, 4
      %s216 = scalar_lea.vmem %s5, %s215
      %p217 = scmp.lt.s32.totalorder %s18, 1
      %s218 = scalar_select %p217, %s18, 1
      %s219 = smul.addr %s218, 2
      %s220 = smul.addr %s219, 4
      %s221 = scalar_lea.vmem %s0, %s220
      %p222 = scmp.lt.s32.totalorder %s18, 1
      %s223 = scalar_select %p222, %s18, 1
      %s224 = smul.addr %s223, 2
      %s225 = smul.addr %s224, 4
      %s226 = scalar_lea.vmem %s5, %s225
      %v227 = vld [vmem:[%s221] sm:$0xff]
      %229 = vst [vmem:[#allocation1] ss:$2 sm:$0xff] %v227
      %v230 = vld.sshfl [vmem:[#allocation1] sm:$0xff pattern:$0x75316420]
      %v231 = vld.sshfl [vmem:[#allocation1 + $0x8] sm:$0xff pattern:$0x75316420]
      %234 = vmatpush.msra.mxu0 1.0
      %235 = vmatpush.msra.mxu0 1.0
      %236 = vmatpush.msra.mxu0 1.0
      %237 = vmatpush.msra.mxu0 1.0
      %238 = vmatpush.msra.mxu0 1.0
      %239 = vmatpush.msra.mxu0 1.0
      %240 = vmatpush.msra.mxu0 1.0
      %241 = vmatpush.msra.mxu0 1.0
      %242 = vmatpush.msra.mxu0 1.0
      %243 = vmatpush.msra.mxu0 1.0
      %244 = vmatpush.msra.mxu0 1.0
      %245 = vmatpush.msra.mxu0 1.0
      %246 = vmatpush.msra.mxu0 1.0
      %247 = vmatpush.msra.mxu0 1.0
      %248 = vmatpush.msra.mxu0 1.0
      %249 = vmatpush.msra.mxu0 1.0
      %v250 = vand.u32 %v230, 4294901760
      %v251 = vsub.f32 %v230, %v250
      %v252 = vand.u32 %v251, 4294901760
      %v253 = vsub.f32 %v251, %v252
      %v254 = vand.u32 %v253, 4294901760
      %255 = vmatmul.f32.gmra.mxu0 %v254
      %v256 = vpop.f32.mrf.mxu0
      %v257 = vadd.f32 0.0, %v256
      %258 = vdwg.mxu0
      %259 = vmatpush.msra.mxu0 0.0
      %260 = vmatpush.msra.mxu0 0.0
      %261 = vmatpush.msra.mxu0 0.0
      %262 = vmatpush.msra.mxu0 0.0
      %263 = vmatpush.msra.mxu0 0.0
      %264 = vmatpush.msra.mxu0 0.0
      %265 = vmatpush.msra.mxu0 0.0
      %266 = vmatpush.msra.mxu0 0.0
      %267 = vmatpush.msra.mxu0 0.0
      %268 = vmatpush.msra.mxu0 0.0
      %269 = vmatpush.msra.mxu0 0.0
      %270 = vmatpush.msra.mxu0 0.0
      %271 = vmatpush.msra.mxu0 0.0
      %272 = vmatpush.msra.mxu0 0.0
      %273 = vmatpush.msra.mxu0 0.0
      %274 = vmatpush.msra.mxu0 0.0
      %v275 = vand.u32 %v230, 4294901760
      %276 = vmatmul.f32.gmra.mxu0 %v275
      %v277 = vpop.f32.mrf.mxu0
      %v278 = vadd.f32 %v257, %v277
      %279 = vdwg.mxu0
      %280 = vmatpush.msra.mxu0 0.0
      %281 = vmatpush.msra.mxu0 0.0
      %282 = vmatpush.msra.mxu0 0.0
      %283 = vmatpush.msra.mxu0 0.0
      %284 = vmatpush.msra.mxu0 0.0
      %285 = vmatpush.msra.mxu0 0.0
      %286 = vmatpush.msra.mxu0 0.0
      %287 = vmatpush.msra.mxu0 0.0
      %288 = vmatpush.msra.mxu0 0.0
      %289 = vmatpush.msra.mxu0 0.0
      %290 = vmatpush.msra.mxu0 0.0
      %291 = vmatpush.msra.mxu0 0.0
      %292 = vmatpush.msra.mxu0 0.0
      %293 = vmatpush.msra.mxu0 0.0
      %294 = vmatpush.msra.mxu0 0.0
      %295 = vmatpush.msra.mxu0 0.0
      %v296 = vand.u32 %v230, 4294901760
      %v297 = vsub.f32 %v230, %v296
      %298 = vmatmul.f32.gmra.mxu0 %v297
      %v299 = vpop.f32.mrf.mxu0
      %v300 = vadd.f32 %v278, %v299
      %301 = vdwg.mxu0
      %302 = vmatpush.msra.mxu0 1.0
      %303 = vmatpush.msra.mxu0 1.0
      %304 = vmatpush.msra.mxu0 1.0
      %305 = vmatpush.msra.mxu0 1.0
      %306 = vmatpush.msra.mxu0 1.0
      %307 = vmatpush.msra.mxu0 1.0
      %308 = vmatpush.msra.mxu0 1.0
      %309 = vmatpush.msra.mxu0 1.0
      %310 = vmatpush.msra.mxu0 1.0
      %311 = vmatpush.msra.mxu0 1.0
      %312 = vmatpush.msra.mxu0 1.0
      %313 = vmatpush.msra.mxu0 1.0
      %314 = vmatpush.msra.mxu0 1.0
      %315 = vmatpush.msra.mxu0 1.0
      %316 = vmatpush.msra.mxu0 1.0
      %317 = vmatpush.msra.mxu0 1.0
      %v318 = vand.u32 %v230, 4294901760
      %v319 = vsub.f32 %v230, %v318
      %v320 = vand.u32 %v319, 4294901760
      %321 = vmatmul.f32.gmra.mxu0 %v320
      %v322 = vpop.f32.mrf.mxu0
      %v323 = vadd.f32 %v300, %v322
      %324 = vdwg.mxu0
      %325 = vmatpush.msra.mxu0 0.0
      %326 = vmatpush.msra.mxu0 0.0
      %327 = vmatpush.msra.mxu0 0.0
      %328 = vmatpush.msra.mxu0 0.0
      %329 = vmatpush.msra.mxu0 0.0
      %330 = vmatpush.msra.mxu0 0.0
      %331 = vmatpush.msra.mxu0 0.0
      %332 = vmatpush.msra.mxu0 0.0
      %333 = vmatpush.msra.mxu0 0.0
      %334 = vmatpush.msra.mxu0 0.0
      %335 = vmatpush.msra.mxu0 0.0
      %336 = vmatpush.msra.mxu0 0.0
      %337 = vmatpush.msra.mxu0 0.0
      %338 = vmatpush.msra.mxu0 0.0
      %339 = vmatpush.msra.mxu0 0.0
      %340 = vmatpush.msra.mxu0 0.0
      %v341 = vand.u32 %v230, 4294901760
      %342 = vmatmul.f32.gmra.mxu0 %v341
      %v343 = vpop.f32.mrf.mxu0
      %v344 = vadd.f32 %v323, %v343
      %345 = vdwg.mxu0
      %346 = vmatpush.msra.mxu0 1.0
      %347 = vmatpush.msra.mxu0 1.0
      %348 = vmatpush.msra.mxu0 1.0
      %349 = vmatpush.msra.mxu0 1.0
      %350 = vmatpush.msra.mxu0 1.0
      %351 = vmatpush.msra.mxu0 1.0
      %352 = vmatpush.msra.mxu0 1.0
      %353 = vmatpush.msra.mxu0 1.0
      %354 = vmatpush.msra.mxu0 1.0
      %355 = vmatpush.msra.mxu0 1.0
      %356 = vmatpush.msra.mxu0 1.0
      %357 = vmatpush.msra.mxu0 1.0
      %358 = vmatpush.msra.mxu0 1.0
      %359 = vmatpush.msra.mxu0 1.0
      %360 = vmatpush.msra.mxu0 1.0
      %361 = vmatpush.msra.mxu0 1.0
      %v362 = vand.u32 %v230, 4294901760
      %363 = vmatmul.f32.gmra.mxu0 %v362
      %v364 = vpop.f32.mrf.mxu0
      %v365 = vadd.f32 %v344, %v364
      %366 = vdwg.mxu0
      %367 = vmatpush.msra.mxu0 1.0
      %368 = vmatpush.msra.mxu0 1.0
      %369 = vmatpush.msra.mxu0 1.0
      %370 = vmatpush.msra.mxu0 1.0
      %371 = vmatpush.msra.mxu0 1.0
      %372 = vmatpush.msra.mxu0 1.0
      %373 = vmatpush.msra.mxu0 1.0
      %374 = vmatpush.msra.mxu0 1.0
      %375 = vmatpush.msra.mxu0 1.0
      %376 = vmatpush.msra.mxu0 1.0
      %377 = vmatpush.msra.mxu0 1.0
      %378 = vmatpush.msra.mxu0 1.0
      %379 = vmatpush.msra.mxu0 1.0
      %380 = vmatpush.msra.mxu0 1.0
      %381 = vmatpush.msra.mxu0 1.0
      %382 = vmatpush.msra.mxu0 1.0
      %v383 = vand.u32 %v231, 4294901760
      %v384 = vsub.f32 %v231, %v383
      %v385 = vand.u32 %v384, 4294901760
      %v386 = vsub.f32 %v384, %v385
      %v387 = vand.u32 %v386, 4294901760
      %388 = vmatmul.f32.gmra.mxu0 %v387
      %v389 = vpop.f32.mrf.mxu0
      %v390 = vadd.f32 %v365, %v389
      %391 = vdwg.mxu0
      %392 = vmatpush.msra.mxu0 0.0
      %393 = vmatpush.msra.mxu0 0.0
      %394 = vmatpush.msra.mxu0 0.0
      %395 = vmatpush.msra.mxu0 0.0
      %396 = vmatpush.msra.mxu0 0.0
      %397 = vmatpush.msra.mxu0 0.0
      %398 = vmatpush.msra.mxu0 0.0
      %399 = vmatpush.msra.mxu0 0.0
      %400 = vmatpush.msra.mxu0 0.0
      %401 = vmatpush.msra.mxu0 0.0
      %402 = vmatpush.msra.mxu0 0.0
      %403 = vmatpush.msra.mxu0 0.0
      %404 = vmatpush.msra.mxu0 0.0
      %405 = vmatpush.msra.mxu0 0.0
      %406 = vmatpush.msra.mxu0 0.0
      %407 = vmatpush.msra.mxu0 0.0
      %v408 = vand.u32 %v231, 4294901760
      %409 = vmatmul.f32.gmra.mxu0 %v408
      %v410 = vpop.f32.mrf.mxu0
      %v411 = vadd.f32 %v390, %v410
      %412 = vdwg.mxu0
      %413 = vmatpush.msra.mxu0 0.0
      %414 = vmatpush.msra.mxu0 0.0
      %415 = vmatpush.msra.mxu0 0.0
      %416 = vmatpush.msra.mxu0 0.0
      %417 = vmatpush.msra.mxu0 0.0
      %418 = vmatpush.msra.mxu0 0.0
      %419 = vmatpush.msra.mxu0 0.0
      %420 = vmatpush.msra.mxu0 0.0
      %421 = vmatpush.msra.mxu0 0.0
      %422 = vmatpush.msra.mxu0 0.0
      %423 = vmatpush.msra.mxu0 0.0
      %424 = vmatpush.msra.mxu0 0.0
      %425 = vmatpush.msra.mxu0 0.0
      %426 = vmatpush.msra.mxu0 0.0
      %427 = vmatpush.msra.mxu0 0.0
      %428 = vmatpush.msra.mxu0 0.0
      %v429 = vand.u32 %v231, 4294901760
      %v430 = vsub.f32 %v231, %v429
      %431 = vmatmul.f32.gmra.mxu0 %v430
      %v432 = vpop.f32.mrf.mxu0
      %v433 = vadd.f32 %v411, %v432
      %434 = vdwg.mxu0
      %435 = vmatpush.msra.mxu0 1.0
      %436 = vmatpush.msra.mxu0 1.0
      %437 = vmatpush.msra.mxu0 1.0
      %438 = vmatpush.msra.mxu0 1.0
      %439 = vmatpush.msra.mxu0 1.0
      %440 = vmatpush.msra.mxu0 1.0
      %441 = vmatpush.msra.mxu0 1.0
      %442 = vmatpush.msra.mxu0 1.0
      %443 = vmatpush.msra.mxu0 1.0
      %444 = vmatpush.msra.mxu0 1.0
      %445 = vmatpush.msra.mxu0 1.0
      %446 = vmatpush.msra.mxu0 1.0
      %447 = vmatpush.msra.mxu0 1.0
      %448 = vmatpush.msra.mxu0 1.0
      %449 = vmatpush.msra.mxu0 1.0
      %450 = vmatpush.msra.mxu0 1.0
      %v451 = vand.u32 %v231, 4294901760
      %v452 = vsub.f32 %v231, %v451
      %v453 = vand.u32 %v452, 4294901760
      %454 = vmatmul.f32.gmra.mxu0 %v453
      %v455 = vpop.f32.mrf.mxu0
      %v456 = vadd.f32 %v433, %v455
      %457 = vdwg.mxu0
      %458 = vmatpush.msra.mxu0 0.0
      %459 = vmatpush.msra.mxu0 0.0
      %460 = vmatpush.msra.mxu0 0.0
      %461 = vmatpush.msra.mxu0 0.0
      %462 = vmatpush.msra.mxu0 0.0
      %463 = vmatpush.msra.mxu0 0.0
      %464 = vmatpush.msra.mxu0 0.0
      %465 = vmatpush.msra.mxu0 0.0
      %466 = vmatpush.msra.mxu0 0.0
      %467 = vmatpush.msra.mxu0 0.0
      %468 = vmatpush.msra.mxu0 0.0
      %469 = vmatpush.msra.mxu0 0.0
      %470 = vmatpush.msra.mxu0 0.0
      %471 = vmatpush.msra.mxu0 0.0
      %472 = vmatpush.msra.mxu0 0.0
      %473 = vmatpush.msra.mxu0 0.0
      %v474 = vand.u32 %v231, 4294901760
      %475 = vmatmul.f32.gmra.mxu0 %v474
      %v476 = vpop.f32.mrf.mxu0
      %v477 = vadd.f32 %v456, %v476
      %478 = vdwg.mxu0
      %479 = vmatpush.msra.mxu0 1.0
      %480 = vmatpush.msra.mxu0 1.0
      %481 = vmatpush.msra.mxu0 1.0
      %482 = vmatpush.msra.mxu0 1.0
      %483 = vmatpush.msra.mxu0 1.0
      %484 = vmatpush.msra.mxu0 1.0
      %485 = vmatpush.msra.mxu0 1.0
      %486 = vmatpush.msra.mxu0 1.0
      %487 = vmatpush.msra.mxu0 1.0
      %488 = vmatpush.msra.mxu0 1.0
      %489 = vmatpush.msra.mxu0 1.0
      %490 = vmatpush.msra.mxu0 1.0
      %491 = vmatpush.msra.mxu0 1.0
      %492 = vmatpush.msra.mxu0 1.0
      %493 = vmatpush.msra.mxu0 1.0
      %494 = vmatpush.msra.mxu0 1.0
      %v495 = vand.u32 %v231, 4294901760
      %496 = vmatmul.f32.gmra.mxu0 %v495
      %v497 = vpop.f32.mrf.mxu0
      %v498 = vadd.f32 %v477, %v497
      %499 = vdwg.mxu0
      %v500 = vld [vmem:[%s1] sm:$0x1]
      %v501 = vld [vmem:[#allocation2] sm:$0x1]
      %vm502 = vcmask 31744
      %v504 = vsel %vm502, %v500, 0
      %vm506 = vcmask 1043456
      %v508 = vsel %vm506, %v498, 0
      %510 = vmatpush.msra.mxu0 0.0
      %511 = vmatpush.msra.mxu0 0.0
      %512 = vmatpush.msra.mxu0 0.0
      %513 = vmatpush.msra.mxu0 0.0
      %514 = vmatpush.msra.mxu0 0.0
      %515 = vmatpush.msra.mxu0 0.0
      %516 = vmatpush.msra.mxu0 0.0
      %517 = vmatpush.msra.mxu0 0.0
      %518 = vmatpush.msra.mxu0 0.0
      %519 = vmatpush.msra.mxu0 0.0
      %520 = vmatpush.msra.mxu0 0.0
      %521 = vmatpush.msra.mxu0 0.0
      %522 = vmatpush.msra.mxu0 0.0
      %523 = vmatpush.msra.mxu0 0.0
      %524 = vmatpush.msra.mxu0 0.0
      %v525 = vand.u32 %v508, 4294901760
      %526 = vmatpush.msra.mxu0 %v525
      %v527 = vand.u32 %v504, 4294901760
      %v528 = vsub.f32 %v504, %v527
      %v529 = vand.u32 %v528, 4294901760
      %v530 = vsub.f32 %v528, %v529
      %v531 = vand.u32 %v530, 4294901760
      %532 = vmatmul.f32.gmra.mxu0 %v531
      %v533 = vpop.f32.mrf.mxu0
      %v534 = vadd.f32 %v501, %v533
      %535 = vdwg.mxu0
      %536 = vmatpush.msra.mxu0 0.0
      %537 = vmatpush.msra.mxu0 0.0
      %538 = vmatpush.msra.mxu0 0.0
      %539 = vmatpush.msra.mxu0 0.0
      %540 = vmatpush.msra.mxu0 0.0
      %541 = vmatpush.msra.mxu0 0.0
      %542 = vmatpush.msra.mxu0 0.0
      %543 = vmatpush.msra.mxu0 0.0
      %544 = vmatpush.msra.mxu0 0.0
      %545 = vmatpush.msra.mxu0 0.0
      %546 = vmatpush.msra.mxu0 0.0
      %547 = vmatpush.msra.mxu0 0.0
      %548 = vmatpush.msra.mxu0 0.0
      %549 = vmatpush.msra.mxu0 0.0
      %550 = vmatpush.msra.mxu0 0.0
      %v551 = vand.u32 %v508, 4294901760
      %v552 = vsub.f32 %v508, %v551
      %v553 = vand.u32 %v552, 4294901760
      %v554 = vsub.f32 %v552, %v553
      %v555 = vand.u32 %v554, 4294901760
      %556 = vmatpush.msra.mxu0 %v555
      %v557 = vand.u32 %v504, 4294901760
      %558 = vmatmul.f32.gmra.mxu0 %v557
      %v559 = vpop.f32.mrf.mxu0
      %v560 = vadd.f32 %v534, %v559
      %561 = vdwg.mxu0
      %562 = vmatpush.msra.mxu0 0.0
      %563 = vmatpush.msra.mxu0 0.0
      %564 = vmatpush.msra.mxu0 0.0
      %565 = vmatpush.msra.mxu0 0.0
      %566 = vmatpush.msra.mxu0 0.0
      %567 = vmatpush.msra.mxu0 0.0
      %568 = vmatpush.msra.mxu0 0.0
      %569 = vmatpush.msra.mxu0 0.0
      %570 = vmatpush.msra.mxu0 0.0
      %571 = vmatpush.msra.mxu0 0.0
      %572 = vmatpush.msra.mxu0 0.0
      %573 = vmatpush.msra.mxu0 0.0
      %574 = vmatpush.msra.mxu0 0.0
      %575 = vmatpush.msra.mxu0 0.0
      %576 = vmatpush.msra.mxu0 0.0
      %v577 = vand.u32 %v508, 4294901760
      %v578 = vsub.f32 %v508, %v577
      %579 = vmatpush.msra.mxu0 %v578
      %v580 = vand.u32 %v504, 4294901760
      %v581 = vsub.f32 %v504, %v580
      %582 = vmatmul.f32.gmra.mxu0 %v581
      %v583 = vpop.f32.mrf.mxu0
      %v584 = vadd.f32 %v560, %v583
      %585 = vdwg.mxu0
      %586 = vmatpush.msra.mxu0 0.0
      %587 = vmatpush.msra.mxu0 0.0
      %588 = vmatpush.msra.mxu0 0.0
      %589 = vmatpush.msra.mxu0 0.0
      %590 = vmatpush.msra.mxu0 0.0
      %591 = vmatpush.msra.mxu0 0.0
      %592 = vmatpush.msra.mxu0 0.0
      %593 = vmatpush.msra.mxu0 0.0
      %594 = vmatpush.msra.mxu0 0.0
      %595 = vmatpush.msra.mxu0 0.0
      %596 = vmatpush.msra.mxu0 0.0
      %597 = vmatpush.msra.mxu0 0.0
      %598 = vmatpush.msra.mxu0 0.0
      %599 = vmatpush.msra.mxu0 0.0
      %600 = vmatpush.msra.mxu0 0.0
      %v601 = vand.u32 %v508, 4294901760
      %602 = vmatpush.msra.mxu0 %v601
      %v603 = vand.u32 %v504, 4294901760
      %v604 = vsub.f32 %v504, %v603
      %v605 = vand.u32 %v604, 4294901760
      %606 = vmatmul.f32.gmra.mxu0 %v605
      %v607 = vpop.f32.mrf.mxu0
      %v608 = vadd.f32 %v584, %v607
      %609 = vdwg.mxu0
      %610 = vmatpush.msra.mxu0 0.0
      %611 = vmatpush.msra.mxu0 0.0
      %612 = vmatpush.msra.mxu0 0.0
      %613 = vmatpush.msra.mxu0 0.0
      %614 = vmatpush.msra.mxu0 0.0
      %615 = vmatpush.msra.mxu0 0.0
      %616 = vmatpush.msra.mxu0 0.0
      %617 = vmatpush.msra.mxu0 0.0
      %618 = vmatpush.msra.mxu0 0.0
      %619 = vmatpush.msra.mxu0 0.0
      %620 = vmatpush.msra.mxu0 0.0
      %621 = vmatpush.msra.mxu0 0.0
      %622 = vmatpush.msra.mxu0 0.0
      %623 = vmatpush.msra.mxu0 0.0
      %624 = vmatpush.msra.mxu0 0.0
      %v625 = vand.u32 %v508, 4294901760
      %v626 = vsub.f32 %v508, %v625
      %v627 = vand.u32 %v626, 4294901760
      %628 = vmatpush.msra.mxu0 %v627
      %v629 = vand.u32 %v504, 4294901760
      %630 = vmatmul.f32.gmra.mxu0 %v629
      %v631 = vpop.f32.mrf.mxu0
      %v632 = vadd.f32 %v608, %v631
      %633 = vdwg.mxu0
      %634 = vmatpush.msra.mxu0 0.0
      %635 = vmatpush.msra.mxu0 0.0
      %636 = vmatpush.msra.mxu0 0.0
      %637 = vmatpush.msra.mxu0 0.0
      %638 = vmatpush.msra.mxu0 0.0
      %639 = vmatpush.msra.mxu0 0.0
      %640 = vmatpush.msra.mxu0 0.0
      %641 = vmatpush.msra.mxu0 0.0
      %642 = vmatpush.msra.mxu0 0.0
      %643 = vmatpush.msra.mxu0 0.0
      %644 = vmatpush.msra.mxu0 0.0
      %645 = vmatpush.msra.mxu0 0.0
      %646 = vmatpush.msra.mxu0 0.0
      %647 = vmatpush.msra.mxu0 0.0
      %648 = vmatpush.msra.mxu0 0.0
      %v649 = vand.u32 %v508, 4294901760
      %650 = vmatpush.msra.mxu0 %v649
      %v651 = vand.u32 %v504, 4294901760
      %652 = vmatmul.f32.gmra.mxu0 %v651
      %v653 = vpop.f32.mrf.mxu0
      %v654 = vadd.f32 %v632, %v653
      %655 = vdwg.mxu0
      %v656 = vmax.f32 %v654, 0.0
      %v657 = vld [vmem:[%s3] sm:$0xf]
      %v658 = vld [vmem:[%s4] sm:$0xf]
      %vm659 = vcmask 7168
      %v661 = vsel %vm659, %v657, 0
      %vm663 = vcmask 1040384
      %v665 = vsel %vm663, %v656, 0
      %667 = vmatpush.msra.mxu0 0.0
      %668 = vmatpush.msra.mxu0 0.0
      %669 = vmatpush.msra.mxu0 0.0
      %670 = vmatpush.msra.mxu0 0.0
      %671 = vmatpush.msra.mxu0 0.0
      %672 = vmatpush.msra.mxu0 0.0
      %673 = vmatpush.msra.mxu0 0.0
      %674 = vmatpush.msra.mxu0 0.0
      %675 = vmatpush.msra.mxu0 0.0
      %676 = vmatpush.msra.mxu0 0.0
      %677 = vmatpush.msra.mxu0 0.0
      %678 = vmatpush.msra.mxu0 0.0
      %679 = vmatpush.msra.mxu0 0.0
      %680 = vmatpush.msra.mxu0 0.0
      %681 = vmatpush.msra.mxu0 0.0
      %v682 = vand.u32 %v665, 4294901760
      %683 = vmatpush.msra.mxu0 %v682
      %v684 = vand.u32 %v661, 4294901760
      %v685 = vsub.f32 %v661, %v684
      %v686 = vand.u32 %v685, 4294901760
      %v687 = vsub.f32 %v685, %v686
      %v688 = vand.u32 %v687, 4294901760
      %689 = vmatmul.f32.gmra.mxu0 %v688
      %v690 = vpop.f32.mrf.mxu0
      %v691 = vadd.f32 %v658, %v690
      %692 = vdwg.mxu0
      %693 = vmatpush.msra.mxu0 0.0
      %694 = vmatpush.msra.mxu0 0.0
      %695 = vmatpush.msra.mxu0 0.0
      %696 = vmatpush.msra.mxu0 0.0
      %697 = vmatpush.msra.mxu0 0.0
      %698 = vmatpush.msra.mxu0 0.0
      %699 = vmatpush.msra.mxu0 0.0
      %700 = vmatpush.msra.mxu0 0.0
      %701 = vmatpush.msra.mxu0 0.0
      %702 = vmatpush.msra.mxu0 0.0
      %703 = vmatpush.msra.mxu0 0.0
      %704 = vmatpush.msra.mxu0 0.0
      %705 = vmatpush.msra.mxu0 0.0
      %706 = vmatpush.msra.mxu0 0.0
      %707 = vmatpush.msra.mxu0 0.0
      %v708 = vand.u32 %v665, 4294901760
      %v709 = vsub.f32 %v665, %v708
      %v710 = vand.u32 %v709, 4294901760
      %v711 = vsub.f32 %v709, %v710
      %v712 = vand.u32 %v711, 4294901760
      %713 = vmatpush.msra.mxu0 %v712
      %v714 = vand.u32 %v661, 4294901760
      %715 = vmatmul.f32.gmra.mxu0 %v714
      %v716 = vpop.f32.mrf.mxu0
      %v717 = vadd.f32 %v691, %v716
      %718 = vdwg.mxu0
      %719 = vmatpush.msra.mxu0 0.0
      %720 = vmatpush.msra.mxu0 0.0
      %721 = vmatpush.msra.mxu0 0.0
      %722 = vmatpush.msra.mxu0 0.0
      %723 = vmatpush.msra.mxu0 0.0
      %724 = vmatpush.msra.mxu0 0.0
      %725 = vmatpush.msra.mxu0 0.0
      %726 = vmatpush.msra.mxu0 0.0
      %727 = vmatpush.msra.mxu0 0.0
      %728 = vmatpush.msra.mxu0 0.0
      %729 = vmatpush.msra.mxu0 0.0
      %730 = vmatpush.msra.mxu0 0.0
      %731 = vmatpush.msra.mxu0 0.0
      %732 = vmatpush.msra.mxu0 0.0
      %733 = vmatpush.msra.mxu0 0.0
      %v734 = vand.u32 %v665, 4294901760
      %v735 = vsub.f32 %v665, %v734
      %736 = vmatpush.msra.mxu0 %v735
      %v737 = vand.u32 %v661, 4294901760
      %v738 = vsub.f32 %v661, %v737
      %739 = vmatmul.f32.gmra.mxu0 %v738
      %v740 = vpop.f32.mrf.mxu0
      %v741 = vadd.f32 %v717, %v740
      %742 = vdwg.mxu0
      %743 = vmatpush.msra.mxu0 0.0
      %744 = vmatpush.msra.mxu0 0.0
      %745 = vmatpush.msra.mxu0 0.0
      %746 = vmatpush.msra.mxu0 0.0
      %747 = vmatpush.msra.mxu0 0.0
      %748 = vmatpush.msra.mxu0 0.0
      %749 = vmatpush.msra.mxu0 0.0
      %750 = vmatpush.msra.mxu0 0.0
      %751 = vmatpush.msra.mxu0 0.0
      %752 = vmatpush.msra.mxu0 0.0
      %753 = vmatpush.msra.mxu0 0.0
      %754 = vmatpush.msra.mxu0 0.0
      %755 = vmatpush.msra.mxu0 0.0
      %756 = vmatpush.msra.mxu0 0.0
      %757 = vmatpush.msra.mxu0 0.0
      %v758 = vand.u32 %v665, 4294901760
      %759 = vmatpush.msra.mxu0 %v758
      %v760 = vand.u32 %v661, 4294901760
      %v761 = vsub.f32 %v661, %v760
      %v762 = vand.u32 %v761, 4294901760
      %763 = vmatmul.f32.gmra.mxu0 %v762
      %v764 = vpop.f32.mrf.mxu0
      %v765 = vadd.f32 %v741, %v764
      %766 = vdwg.mxu0
      %767 = vmatpush.msra.mxu0 0.0
      %768 = vmatpush.msra.mxu0 0.0
      %769 = vmatpush.msra.mxu0 0.0
      %770 = vmatpush.msra.mxu0 0.0
      %771 = vmatpush.msra.mxu0 0.0
      %772 = vmatpush.msra.mxu0 0.0
      %773 = vmatpush.msra.mxu0 0.0
      %774 = vmatpush.msra.mxu0 0.0
      %775 = vmatpush.msra.mxu0 0.0
      %776 = vmatpush.msra.mxu0 0.0
      %777 = vmatpush.msra.mxu0 0.0
      %778 = vmatpush.msra.mxu0 0.0
      %779 = vmatpush.msra.mxu0 0.0
      %780 = vmatpush.msra.mxu0 0.0
      %781 = vmatpush.msra.mxu0 0.0
      %v782 = vand.u32 %v665, 4294901760
      %v783 = vsub.f32 %v665, %v782
      %v784 = vand.u32 %v783, 4294901760
      %785 = vmatpush.msra.mxu0 %v784
      %v786 = vand.u32 %v661, 4294901760
      %787 = vmatmul.f32.gmra.mxu0 %v786
      %v788 = vpop.f32.mrf.mxu0
      %v789 = vadd.f32 %v765, %v788
      %790 = vdwg.mxu0
      %791 = vmatpush.msra.mxu0 0.0
      %792 = vmatpush.msra.mxu0 0.0
      %793 = vmatpush.msra.mxu0 0.0
      %794 = vmatpush.msra.mxu0 0.0
      %795 = vmatpush.msra.mxu0 0.0
      %796 = vmatpush.msra.mxu0 0.0
      %797 = vmatpush.msra.mxu0 0.0
      %798 = vmatpush.msra.mxu0 0.0
      %799 = vmatpush.msra.mxu0 0.0
      %800 = vmatpush.msra.mxu0 0.0
      %801 = vmatpush.msra.mxu0 0.0
      %802 = vmatpush.msra.mxu0 0.0
      %803 = vmatpush.msra.mxu0 0.0
      %804 = vmatpush.msra.mxu0 0.0
      %805 = vmatpush.msra.mxu0 0.0
      %v806 = vand.u32 %v665, 4294901760
      %807 = vmatpush.msra.mxu0 %v806
      %v808 = vand.u32 %v661, 4294901760
      %809 = vmatmul.f32.gmra.mxu0 %v808
      %v810 = vpop.f32.mrf.mxu0
      %v811 = vadd.f32 %v789, %v810
      %812 = vdwg.mxu0
      %v813 = vxor.u32 %v811, 2147483648
      %v814 = vmul.f32 %v813, 1.442695
      %v815 = vpow.pop %v814
      %v816 = vadd.f32 %v815, 1.0
      %v817 = vrcp.pop %v816
      %v818 = vmul.f32 %v816, %v817
      %v819 = vsub.f32 1.0, %v818
      %v820 = vmul.f32 %v817, %v819
      %v821 = vadd.f32 %v817, %v820
      %vm822 = vweird.f32 %v816
      %vm823 = vweird.f32 %v817
      %vm824 = vmor %vm822, %vm823
      %v825 = vsel %vm824, %v817, %v821
      %v826 = vand.u32 2147483647, %v816
      %vm827 = vcmp.eq.f32.partialorder %v826, 8.507059e+37
      %v828 = vand.u32 %v816, 2147483648
      %v829 = vor.u32 1.1754944e-38, %v828
      %v830 = vsel %vm827, %v829, %v825
      %v831 = vmul.f32 1.0, %v830
      %833 = vset.pattern.permute.xlu0 0
      %834 = vperm.xlu0 %833, %v831
      %v835 = vpop.permute.xlu0 %834
      %v837 = vunpack.c.l.s4 839922192
      %v838 = vunpack.c.0.s8 %v837
      %v839 = vperm.slane %v835, %v838
      %v841 = vmul.f32 %v227, %v839
      %842 = vst [vmem:[%s226] sm:$0xff] %v841
      %p843 = scmp.lt.s32.totalorder %s18, 1
      %s844 = scalar_select %p843, %s18, 1
      %s845 = smul.addr %s844, 2
      %s846 = smul.addr %s845, 4
      %s847 = scalar_lea.vmem %s5, %s846
      // Predicated region
      $region41: #{squeeze_excite.1} parent=39 // pred_check
        %p848 = pneg %p146
      $region42: #{squeeze_excite.1} parent=39 // pred_check_branch
        %850 = sbr.rel (%p848) target = $region44
      $region43: #{squeeze_excite.1} parent=39 // pred_region
        _
      $region44: #{squeeze_excite.1} parent=39 // pred_fallthru
        _
    $region40: #{squeeze_excite.1} parent=5 // pred_fallthru
      _
    %p851 = scmp.le.s32.totalorder 2, %s13
    // Predicated region
    $region45: #{squeeze_excite.1} parent=5 // pred_check
      %p852 = pneg %p851
    $region46: #{squeeze_excite.1} parent=5 // pred_check_branch
      %854 = sbr.rel (%p852) target = $region48
    $region47: #{squeeze_excite.1} parent=5 // pred_region
      %s855 = ssub.s32 %s13, 2
      // Predicated region
      $region49: #{squeeze_excite.1} parent=47 // pred_check
        %p856 = pneg %p152
      $region50: #{squeeze_excite.1} parent=47 // pred_check_branch
        %858 = sbr.rel (%p856) target = $region52
      $region51: #{squeeze_excite.1} parent=47 // pred_region
        %p859 = scmp.lt.s32.totalorder %s19, 1
        %s860 = scalar_select %p859, %s19, 1
        %s861 = smul.addr %s860, 2
        %s862 = smul.addr %s861, 4
        %s863 = scalar_lea.vmem %s5, %s862
      $region52: #{squeeze_excite.1} parent=47 // pred_fallthru
        _
    $region48: #{squeeze_excite.1} parent=5 // pred_fallthru
      _
  $region6: #{squeeze_excite.1} parent=0 // loop_footer
    %s17 = sadd.s32 1, %s13
  $region7: #{squeeze_excite.1} parent=0 // loop_footer_branch
    %12 = sbr.rel target = $region3
  $region8: #{squeeze_excite.1} parent=0 // loop_exit
    _

</llo_original>
